<compile_context>
chip_gen: v7x
topology: tpu7x:2x2x1
jax: 0.10.0
libtpu: 0.0.40
codegen_flags: <defaults>
</compile_context>

<pallas_src>
import jax
import jax.numpy as jnp
from jax.experimental import pallas as pl
from jax.experimental.pallas import tpu as pltpu

HIDDEN = 128


def _round_up(x, m):
    return ((x + m - 1) // m) * m


def pack_params(w1, b1, w2_row, dtype=jnp.float32):
    """Pack W1 [L,H], b1 [1,H], W2-row [1,H] into one sublane-aligned [r1+16, H] slab.

    Row layout:  rows [0:L)      -> W1
                 row  r1         -> b1        (r1 = round_up(L, 8), sublane-aligned)
                 row  r1 + 8     -> W2 row
    """
    L, H = w1.shape
    r1 = _round_up(L, 8)
    slab = jnp.zeros((r1 + 16, H), dtype)
    slab = slab.at[0:L, :].set(w1.astype(dtype))
    slab = slab.at[r1, :].set(b1.reshape(H).astype(dtype))
    slab = slab.at[r1 + 8, :].set(w2_row.reshape(H).astype(dtype))
    return slab, r1


def mlp_head(probs, param_slab, b2, num_labels, r1, *, batch_tile=None):
    """linear1 -> relu -> linear2 -> sigmoid in one Pallas kernel.

    probs:      [B, num_labels] f32
    param_slab: [r1+16, 128]    packed {W1, b1, W2-row} (f32 or bf16)
    b2:         [1]             f32 scalar, kept in SMEM
    batch_tile: None -> gridless (small B); int -> batch grid ("parallel" axis).
    """
    B, L = probs.shape
    assert L == num_labels

    def kernel(x_ref, p_ref, b2_ref, out_ref):
        # Static, zero-cost views into the packed parameter slab.
        w1 = p_ref[0:num_labels, :]                       # [L, 128]
        b1 = p_ref[r1:r1 + 1, :].astype(jnp.float32)      # [1, 128]
        w2 = p_ref[r1 + 8:r1 + 9, :].astype(jnp.float32)  # [1, 128]

        # Layer 1: MXU matmul (bf16 operands if the slab is bf16) + f32 bias/ReLU on VPU.
        x = x_ref[...].astype(w1.dtype)
        h = jnp.dot(x, w1, preferred_element_type=jnp.float32) + b1
        h = jnp.maximum(h, 0.0)

        # Layer 2 (output width 1): VPU multiply + XLU row reduction instead of an
        # MXU matmul that would waste 255/256 output lanes.  All f32 (v5e-safe).
        y = jnp.sum(h * w2, axis=-1, keepdims=True) + b2_ref[0]

        # Exact sigmoid: exp on the EUP, exact divide (latency fully hidden here).
        out_ref[...] = (1.0 / (1.0 + jnp.exp(-y))).astype(out_ref.dtype)

    bytes_in = (probs.size * probs.dtype.itemsize
                + param_slab.size * param_slab.dtype.itemsize
                + b2.size * b2.dtype.itemsize)
    cost = pl.CostEstimate(
        flops=2 * B * L * HIDDEN + 6 * B * HIDDEN + 8 * B,
        transcendentals=B,
        bytes_accessed=bytes_in + B * 4,
    )
    out_shape = jax.ShapeDtypeStruct((B, 1), jnp.float32)

    if batch_tile is None:
        # Gridless: whole arrays in VMEM, no pipeline prologue/epilogue overhead.
        return pl.pallas_call(
            kernel,
            out_shape=out_shape,
            in_specs=[
                pl.BlockSpec(memory_space=pltpu.MemorySpace.VMEM),   # probs
                pl.BlockSpec(memory_space=pltpu.MemorySpace.VMEM),   # packed params
                pl.BlockSpec(memory_space=pltpu.MemorySpace.SMEM),   # b2 scalar (1-D)
            ],
            out_specs=pl.BlockSpec(memory_space=pltpu.MemorySpace.VMEM),
            cost_estimate=cost,
        )(probs, param_slab, b2)

    # Batched path for large B: parallel batch grid (both v7x TensorCores),
    # parameter slab resident in VMEM across all grid steps.
    assert B % batch_tile == 0
    return pl.pallas_call(
        kernel,
        out_shape=out_shape,
        grid=(B // batch_tile,),
        in_specs=[
            pl.BlockSpec((batch_tile, L), lambda i: (i, 0)),          # probs tile
            pl.BlockSpec(param_slab.shape, lambda i: (0, 0)),         # resident params
            pl.BlockSpec(memory_space=pltpu.MemorySpace.SMEM),        # b2 scalar
        ],
        out_specs=pl.BlockSpec((batch_tile, 1), lambda i: (i, 0)),
        compiler_params=pltpu.CompilerParams(dimension_semantics=("parallel",)),
        cost_estimate=cost,
    )(probs, param_slab, b2)


def init_params(key, num_labels, hidden=HIDDEN):
    """Deterministic init mimicking torch.nn.Linear default (uniform +-1/sqrt(fan_in))."""
    k1, k2, k3, k4 = jax.random.split(key, 4)
    bound1 = 1.0 / jnp.sqrt(num_labels)
    bound2 = 1.0 / jnp.sqrt(hidden)
    # W1 stored as (in, out) so the kernel computes x @ W1
    # (== torch's x @ W.T with torch's (out, in) layout).
    w1 = jax.random.uniform(k1, (num_labels, hidden), jnp.float32, -bound1, bound1)
    b1 = jax.random.uniform(k2, (1, hidden), jnp.float32, -bound1, bound1)
    # W2 stored as a row vector (1, hidden): second-layer output width is 1.
    w2_row = jax.random.uniform(k3, (1, hidden), jnp.float32, -bound2, bound2)
    b2 = jax.random.uniform(k4, (1,), jnp.float32, -bound2, bound2)
    return w1, b1, w2_row, b2


def model_wrapper_forward(probs, packed_params, *, batch_tile=None):
    """Pallas equivalent of ModelWrapper.forward: returns (output, probs)."""
    # TODO(synk): probs = self.model.predict(x) happens outside (black-box model).
    param_slab, b2, num_labels, r1 = packed_params
    output = mlp_head(probs, param_slab, b2, num_labels, r1, batch_tile=batch_tile)
    return output, probs


if __name__ == "__main__":
    key = jax.random.PRNGKey(0)
    k_probs, k_params, k_probs2 = jax.random.split(key, 3)

    B, NUM_LABELS = 8, 32
    # Synthetic `probs` standing in for self.model.predict(x) -> softmax-like probabilities.
    logits = jax.random.normal(k_probs, (B, NUM_LABELS), jnp.float32)
    probs = jax.nn.softmax(logits, axis=-1)

    w1, b1, w2_row, b2 = init_params(k_params, NUM_LABELS)

    # --- Path 1: f32 params, gridless (the actual ModelWrapper-sized problem) ---
    slab_f32, r1 = pack_params(w1, b1, w2_row, jnp.float32)
    output, probs_out = model_wrapper_forward(probs, (slab_f32, b2, NUM_LABELS, r1))
    jax.block_until_ready((output, probs_out))

    ref = jax.nn.sigmoid(jnp.maximum(probs @ w1 + b1, 0.0) @ w2_row.T + b2)
    assert output.shape == (B, 1)
    assert probs_out.shape == (B, NUM_LABELS)
    assert jnp.allclose(output, ref, atol=1e-4, rtol=1e-4), (
        jnp.max(jnp.abs(output - ref))
    )

    # --- Path 2: bf16 param slab + batch-tiled parallel grid (v6e/v7x scaling path) ---
    B2, TB = 256, 128
    probs2 = jax.nn.softmax(
        jax.random.normal(k_probs2, (B2, NUM_LABELS), jnp.float32), axis=-1)
    slab_bf16, _ = pack_params(w1, b1, w2_row, jnp.bfloat16)
    output2, _ = model_wrapper_forward(
        probs2, (slab_bf16, b2, NUM_LABELS, r1), batch_tile=TB)
    jax.block_until_ready(output2)

    ref2 = jax.nn.sigmoid(jnp.maximum(probs2 @ w1 + b1, 0.0) @ w2_row.T + b2)
    assert output2.shape == (B2, 1)
    assert jnp.allclose(output2, ref2, atol=1e-2, rtol=1e-2), (
        jnp.max(jnp.abs(output2 - ref2))
    )

    print("KERNEL_OK")
</pallas_src>

<mosaic_0001>
module attributes {stable_mosaic.version = 11 : i64} {
  func.func @kernel(%arg0: memref<8x32xf32, #tpu.memory_space<vmem>>, %arg1: memref<48x128xf32, #tpu.memory_space<vmem>>, %arg2: memref<1xf32, #tpu.memory_space<smem>>, %arg3: memref<8x1xf32, #tpu.memory_space<vmem>>) attributes {dimension_semantics = [], scalar_prefetch = 0 : i64, scratch_operands = 0 : i64, tpu.core_type = #tpu.core_type<tc>} {
    %c0 = arith.constant 0 : index
    %c0_0 = arith.constant 0 : index
    %0 = vector.load %arg1[%c0, %c0_0] : memref<48x128xf32, #tpu.memory_space<vmem>>, vector<32x128xf32>
    %c32 = arith.constant 32 : index
    %c0_1 = arith.constant 0 : index
    %1 = vector.load %arg1[%c32, %c0_1] : memref<48x128xf32, #tpu.memory_space<vmem>>, vector<1x128xf32>
    %c40 = arith.constant 40 : index
    %c0_2 = arith.constant 0 : index
    %2 = vector.load %arg1[%c40, %c0_2] : memref<48x128xf32, #tpu.memory_space<vmem>>, vector<1x128xf32>
    %c0_3 = arith.constant 0 : index
    %c0_4 = arith.constant 0 : index
    %3 = vector.load %arg0[%c0_3, %c0_4] : memref<8x32xf32, #tpu.memory_space<vmem>>, vector<8x32xf32>
    %cst = arith.constant dense<0.000000e+00> : vector<8x128xf32>
    %4 = tpu.matmul %3, %0, %cst {dimension_numbers = #tpu.dot_dimension_numbers<[1], [0], [0], [1], [0, 0, 1, 1], [], []>} : vector<8x32xf32>, vector<32x128xf32>, vector<8x128xf32> -> vector<8x128xf32>
    %5 = vector.broadcast %1 : vector<1x128xf32> to vector<8x128xf32>
    %6 = arith.addf %4, %5 : vector<8x128xf32>
    %cst_5 = arith.constant 0.000000e+00 : f32
    %7 = vector.broadcast %cst_5 : f32 to vector<8x128xf32>
    %8 = arith.maximumf %6, %7 : vector<8x128xf32>
    %9 = vector.broadcast %2 : vector<1x128xf32> to vector<8x128xf32>
    %10 = arith.mulf %8, %9 : vector<8x128xf32>
    %cst_6 = arith.constant dense<0.000000e+00> : vector<8xf32>
    %11 = vector.multi_reduction <add>, %10, %cst_6 [1] : vector<8x128xf32> to vector<8xf32>
    %12 = vector.shape_cast %11 : vector<8xf32> to vector<8x1xf32>
    %c0_7 = arith.constant 0 : index
    %13 = memref.load %arg2[%c0_7] : memref<1xf32, #tpu.memory_space<smem>>
    %14 = vector.broadcast %13 : f32 to vector<8x1xf32>
    %15 = arith.addf %12, %14 : vector<8x1xf32>
    %cst_8 = arith.constant 0.000000e+00 : f32
    %16 = vector.broadcast %cst_8 : f32 to vector<8x1xf32>
    %17 = arith.subf %16, %15 : vector<8x1xf32>
    %18 = math.exp %17 : vector<8x1xf32>
    %cst_9 = arith.constant 1.000000e+00 : f32
    %19 = vector.broadcast %cst_9 : f32 to vector<8x1xf32>
    %20 = arith.addf %19, %18 : vector<8x1xf32>
    %cst_10 = arith.constant 1.000000e+00 : f32
    %21 = vector.broadcast %cst_10 : f32 to vector<8x1xf32>
    %22 = arith.divf %21, %20 : vector<8x1xf32>
    %c0_11 = arith.constant 0 : index
    %c0_12 = arith.constant 0 : index
    %23 = vector.load %arg3[%c0_11, %c0_12] : memref<8x1xf32, #tpu.memory_space<vmem>>, vector<8x1xf32>
    tpu.vector_store %arg3[%c0_11, %c0_12], %22 {strides = array<i32>} : memref<8x1xf32, #tpu.memory_space<vmem>>, vector<8x1xf32>,
    return
  }
}

</mosaic_0001>

<llo_original>
// kernel: tpu_custom_call.1
$region0: #{tpu_custom_call.1}
  #allocation0 [shape = 'u32[]', space=smem, size = 0x4, offset = 0x4, fixed_abs, tag = 'smem constant byte address 0x4 - core index']
  #allocation1 [shape = 'u32[144,128]{1,0:T(1,128)}', space=vmem, size = 0x12000, scoped, tag = 'internal scratch']
  #allocation2 [shape = 'f32[1]{0:T(128)S(6)}', space=smem, size = 0x200, scoped, tag = 'scoped memory for tpu_custom_call.1']
  %s0 = inlined_call_operand.hbm [shape: f32[8,32], index: 0, kind: input, shape index: {}]
  %s1 = inlined_call_operand.hbm [shape: f32[48,128], index: 1, kind: input, shape index: {}]
  %s2 = inlined_call_operand.<no memory space> [shape: f32[1], index: 2, kind: input, shape index: {}]
  %s3 = inlined_call_operand.vmem [shape: f32[8,1], index: 3, kind: output, shape index: {}]
  %s4 = sld [smem:[#allocation0]]
  $region30: #{tpu_custom_call.1} parent=0
    _
  %s6 = ssub.s32 1, %s4
  %s7 = scalar_select 0, %s6, %s4
  %8 = sst [smem:[#allocation2]] %s2
  $region1: #{tpu_custom_call.1} parent=0
    #allocation3 [shape = 'u8[4096]{0}', space=vmem, size = 0x1000, scoped, tag = 'input window, operand 0, single buffered']
    #allocation4 [shape = 's32[1]{0}', space=sflag, size = 0x4, scoped, tag = 'scoped memory for tpu_custom_call.1']
    #allocation5 [shape = 'u8[24576]{0}', space=vmem, size = 0x6000, scoped, tag = 'input window, operand 1, single buffered']
    #allocation6 [shape = 's32[1]{0}', space=sflag, size = 0x4, scoped, tag = 'scoped memory for tpu_custom_call.1']
    %9 = vsyncpa [#allocation4], 0
    %10 = vsyncpa [#allocation6], 0
    // Predicated region
    $region2: #{tpu_custom_call.1} parent=1 // pred_check
      _
    $region3: #{tpu_custom_call.1} parent=1 // pred_check_branch
      %12 = sbr.rel (0) target = $region5
    $region4: #{tpu_custom_call.1} parent=1 // pred_region
      %s14 = ssub.s32 128, 128
      %15 = vsyncadd [#allocation4], %s14
      %s17 = sshll.u32 [#allocation3], 4
      %s18 = int_to_ptr.vmem [resolvable:$true] %s17
      %20 = dma.hbm_to_vmem [thread:$0]  %s0, 128, %s18, [#allocation4]
    $region5: #{tpu_custom_call.1} parent=1 // pred_fallthru
      _
    // Predicated region
    $region6: #{tpu_custom_call.1} parent=1 // pred_check
      _
    $region7: #{tpu_custom_call.1} parent=1 // pred_check_branch
      %22 = sbr.rel (0) target = $region9
    $region8: #{tpu_custom_call.1} parent=1 // pred_region
      %s24 = ssub.s32 768, 768
      %25 = vsyncadd [#allocation6], %s24
      %s26 = sshll.u32 [#allocation5], 4
      %s27 = int_to_ptr.vmem [resolvable:$true] %s26
      %32 = dma.hbm_to_vmem [thread:$0]  %s1, 768, %s27, [#allocation6], 128, 128, 8
    $region9: #{tpu_custom_call.1} parent=1 // pred_fallthru
      _
    // Predicated region
    $region10: #{tpu_custom_call.1} parent=1 // pred_check
      _
    $region11: #{tpu_custom_call.1} parent=1 // pred_check_branch
      %34 = sbr.rel (0) target = $region13
    $region12: #{tpu_custom_call.1} parent=1 // pred_region
      _
    $region13: #{tpu_custom_call.1} parent=1 // pred_fallthru
      _
    // Predicated region
    $region14: #{tpu_custom_call.1} parent=1 // pred_check
      _
    $region15: #{tpu_custom_call.1} parent=1 // pred_check_branch
      %36 = sbr.rel (0) target = $region17
    $region16: #{tpu_custom_call.1} parent=1 // pred_region
      %37 = dma.done [#allocation4], 128
    $region17: #{tpu_custom_call.1} parent=1 // pred_fallthru
      _
    // Predicated region
    $region18: #{tpu_custom_call.1} parent=1 // pred_check
      _
    $region19: #{tpu_custom_call.1} parent=1 // pred_check_branch
      %39 = sbr.rel (0) target = $region21
    $region20: #{tpu_custom_call.1} parent=1 // pred_region
      %40 = dma.done [#allocation6], 768
    $region21: #{tpu_custom_call.1} parent=1 // pred_fallthru
      _
    %v41 = vld [vmem:[#allocation5] sm:$0xff]
    %v42 = vld [vmem:[#allocation5 + $0x8] sm:$0xff]
    %v43 = vld [vmem:[#allocation5 + $0x10] sm:$0xff]
    %v44 = vld [vmem:[#allocation5 + $0x18] sm:$0xff]
    %v45 = vld [vmem:[#allocation5 + $0x20] sm:$0x1]
    %v46 = vld [vmem:[#allocation5 + $0x28] sm:$0x1]
    %v47 = vld [vmem:[#allocation3] sm:$0xff]
    %v48 = vlaneseq
    %v49 = vshrl.u32 %v48, 7
    %v50 = vsub.s32 0, %v49
    %v51 = vrot.slane %v45, %v50
    %vm52 = vcmask 261120
    %v54 = vsel %vm52, %v47, 0
    %56 = vmatprep.subr.mxu0 0.0
    %57 = vmatpush1.msra.mxu0 %v41
    %58 = vmatprep.subr.mxu0 0.0
    %59 = vmatpush1.msra.mxu0 %v42
    %60 = vmatprep.subr.mxu0 0.0
    %61 = vmatpush1.msra.mxu0 %v43
    %62 = vmatprep.subr.mxu0 0.0
    %63 = vmatpush1.msra.mxu0 %v44
    %64 = vmatprep.subr.mxu0 0.0
    %65 = vmatpush1.msra.mxu0 0.0
    %66 = vmatprep.subr.mxu0 0.0
    %67 = vmatpush1.msra.mxu0 0.0
    %68 = vmatprep.subr.mxu0 0.0
    %69 = vmatpush1.msra.mxu0 0.0
    %70 = vmatprep.subr.mxu0 0.0
    %71 = vmatpush1.msra.mxu0 0.0
    %72 = vmatprep.subr.mxu0 0.0
    %73 = vmatpush1.msra.mxu0 0.0
    %74 = vmatprep.subr.mxu0 0.0
    %75 = vmatpush1.msra.mxu0 0.0
    %76 = vmatprep.subr.mxu0 0.0
    %77 = vmatpush1.msra.mxu0 0.0
    %78 = vmatprep.subr.mxu0 0.0
    %79 = vmatpush1.msra.mxu0 0.0
    %80 = vmatprep.subr.mxu0 0.0
    %81 = vmatpush1.msra.mxu0 0.0
    %82 = vmatprep.subr.mxu0 0.0
    %83 = vmatpush1.msra.mxu0 0.0
    %84 = vmatprep.subr.mxu0 0.0
    %85 = vmatpush1.msra.mxu0 0.0
    %86 = vmatprep.subr.mxu0 0.0
    %87 = vmatpush1.msra.mxu0 0.0
    %88 = vmatprep.subr.mxu0 0.0
    %89 = vmatpush1.msra.mxu0 0.0
    %90 = vmatprep.subr.mxu0 0.0
    %91 = vmatpush1.msra.mxu0 0.0
    %92 = vmatprep.subr.mxu0 0.0
    %93 = vmatpush1.msra.mxu0 0.0
    %94 = vmatprep.subr.mxu0 0.0
    %95 = vmatpush1.msra.mxu0 0.0
    %96 = vmatprep.subr.mxu0 0.0
    %97 = vmatpush1.msra.mxu0 0.0
    %98 = vmatprep.subr.mxu0 0.0
    %99 = vmatpush1.msra.mxu0 0.0
    %100 = vmatprep.subr.mxu0 0.0
    %101 = vmatpush1.msra.mxu0 0.0
    %102 = vmatprep.subr.mxu0 0.0
    %103 = vmatpush1.msra.mxu0 0.0
    %104 = vmatprep.subr.mxu0 0.0
    %105 = vmatpush1.msra.mxu0 0.0
    %106 = vmatprep.subr.mxu0 0.0
    %107 = vmatpush1.msra.mxu0 0.0
    %108 = vmatprep.subr.mxu0 0.0
    %109 = vmatpush1.msra.mxu0 0.0
    %110 = vmatprep.subr.mxu0 0.0
    %111 = vmatpush1.msra.mxu0 0.0
    %112 = vmatprep.subr.mxu0 0.0
    %113 = vmatpush1.msra.mxu0 0.0
    %114 = vmatprep.subr.mxu0 0.0
    %115 = vmatpush1.msra.mxu0 0.0
    %116 = vmatprep.subr.mxu0 0.0
    %117 = vmatpush1.msra.mxu0 0.0
    %118 = vmatprep.subr.mxu0 0.0
    %119 = vmatpush1.msra.mxu0 0.0
    %120 = vmatprep.mubr.f32.mxu0 0.0
    %121 = vmatmul.mubr.f32.gmra.mrb[0].mxu0 %v54
    %v122 = vpop.f32.mrb[0].mxu0
    %v123 = vadd.f32 %v51, %v122
    %v124 = vpop.f32.mrb[0].mxu0
    %125 = vdwg.mxu0
    %v126 = vmax.f32 %v123, 0.0
    %v127 = vlaneseq
    %v128 = vshrl.u32 %v127, 7
    %v129 = vsub.s32 0, %v128
    %v130 = vrot.slane %v46, %v129
    %v131 = vmul.f32 %v126, %v130
    %132 = vadd.xlane.f32.xlu0 %v131
    %v133 = vpop.xlane.xlu0 %132
    %s134 = sld [smem:[#allocation2]]
    %v135 = vstv %s134
    %v136 = vadd.f32 %v133, %v135
    %v137 = vsub.f32 0.0, %v136
    %v138 = vmul.f32 %v137, 1.442695
    %v139 = vpow.pop %v138
    %v140 = vadd.f32 %v139, 1.0
    %v141 = vrcp.pop %v140
    %v142 = vmul.f32 1.0, %v141
    %vm143 = vcmask 7168
    %144 = vst.msk [vmem:[%s3] sm:$0xff] %vm143, %v142
    // Predicated region
    $region22: #{tpu_custom_call.1} parent=1 // pred_check
      _
    $region23: #{tpu_custom_call.1} parent=1 // pred_check_branch
      %146 = sbr.rel (0) target = $region25
    $region24: #{tpu_custom_call.1} parent=1 // pred_region
      _
    $region25: #{tpu_custom_call.1} parent=1 // pred_fallthru
      _
    // Predicated region
    $region26: #{tpu_custom_call.1} parent=1 // pred_check
      _
    $region27: #{tpu_custom_call.1} parent=1 // pred_check_branch
      %148 = sbr.rel (0) target = $region29
    $region28: #{tpu_custom_call.1} parent=1 // pred_region
      _
    $region29: #{tpu_custom_call.1} parent=1 // pred_fallthru
      _
    %149 = vsyncpa [#allocation4], 1
    %150 = vsyncpa [#allocation6], 1

</llo_original>
